<compile_context>
chip_gen: v7x
topology: tpu7x:2x2x1
jax: 0.10.0
libtpu: 0.0.40
codegen_flags: <defaults>
</compile_context>

<pallas_src>
import jax
import jax.numpy as jnp
from jax.experimental import pallas as pl
from jax.experimental.pallas import tpu as pltpu


# ---------------------------------------------------------------------------
# Kernel
# ---------------------------------------------------------------------------
def _mlp_kernel(x_ref, wb_ref, o_ref):
    # x_ref : (8, TB)   transposed, zero-padded input tile (batch on lanes)
    # wb_ref: (64, 128) packed parameter slab, resident across grid steps
    #         rows  0: 8  -> W1 (out,in) zero-padded to (8,8)
    #         rows  8:16  -> W2, rows 16:24 -> W3, rows 24:32 -> W4
    #         rows 32:40 col0 -> b1, 40:48 -> b2, 48:56 -> b3, 56:64 -> b4
    # o_ref : (d_out, TB)
    xt = x_ref[...]                                   # (8, TB)

    w1 = wb_ref[0:8,   0:8]
    w2 = wb_ref[8:16,  0:8]
    w3 = wb_ref[16:24, 0:8]
    w4 = wb_ref[24:32, 0:8]
    b1 = wb_ref[32:40, 0:1]                           # (8,1) lane-broadcast
    b2 = wb_ref[40:48, 0:1]
    b3 = wb_ref[48:56, 0:1]
    b4 = wb_ref[56:64, 0:1]

    h = jnp.maximum(jnp.dot(w1, xt, preferred_element_type=jnp.float32) + b1, 0.0)
    h = jnp.maximum(jnp.dot(w2, h,  preferred_element_type=jnp.float32) + b2, 0.0)
    h = jnp.maximum(jnp.dot(w3, h,  preferred_element_type=jnp.float32) + b3, 0.0)
    out = jnp.dot(w4, h, preferred_element_type=jnp.float32) + b4   # (8, TB)

    o_ref[...] = out[: o_ref.shape[0], :].astype(o_ref.dtype)       # (d_out, TB)


# ---------------------------------------------------------------------------
# Parameter packing (one resident VMEM slab)
# ---------------------------------------------------------------------------
def pack_params(params):
    """Pack 4 (in,out) weights + 4 (out,) biases into one (64,128) f32 slab."""
    slab = jnp.zeros((64, 128), jnp.float32)
    for i in range(4):
        w = params[f"w{i + 1}"].T.astype(jnp.float32)   # PyTorch layout (out, in)
        b = params[f"b{i + 1}"].astype(jnp.float32)
        assert w.shape[0] <= 8 and w.shape[1] <= 8, "layer dims must be <= 8"
        slab = slab.at[8 * i: 8 * i + w.shape[0], : w.shape[1]].set(w)
        slab = slab.at[32 + 8 * i: 32 + 8 * i + b.shape[0], 0].set(b)
    return slab


# ---------------------------------------------------------------------------
# Wrapper
# ---------------------------------------------------------------------------
def fcffnn_forward(x, params, *, tb_max=2048):
    """x: (B, d_in) float32 (d_in <= 8). Returns (B, d_out) float32."""
    B, d_in = x.shape
    assert d_in <= 8, "this fused kernel packs the input features into 8 sublanes"
    d_out = params["w4"].shape[1]

    wb = pack_params(params)                              # (64, 128) slab

    # Batch tile (lanes): multiple of 128, up to tb_max.
    tb = min(tb_max, pl.cdiv(B, 128) * 128)
    b_pad = pl.cdiv(B, tb) * tb
    grid = (b_pad // tb,)

    # Transposed, zero-padded input: (8, B_pad) -> batch on lanes.
    x_t = jnp.zeros((8, b_pad), jnp.float32).at[:d_in, :B].set(
        x.astype(jnp.float32).T)

    out_t = pl.pallas_call(
        _mlp_kernel,
        out_shape=jax.ShapeDtypeStruct((d_out, b_pad), jnp.float32),
        grid_spec=pltpu.PrefetchScalarGridSpec(
            num_scalar_prefetch=0,
            grid=grid,
            in_specs=[
                pl.BlockSpec((8, tb), lambda i: (0, i)),       # x tile (pipelined)
                pl.BlockSpec((64, 128), lambda i: (0, 0)),     # params, resident
            ],
            out_specs=pl.BlockSpec((d_out, tb), lambda i: (0, i)),
        ),
        compiler_params=pltpu.CompilerParams(
            dimension_semantics=("parallel",)),                # megacore on v7x
    )(x_t, wb)

    return out_t[:, :B].T                                      # (B, d_out)


# ---------------------------------------------------------------------------
# Init + reference
# ---------------------------------------------------------------------------
def init_params(key, d_in, h1=6, h2=8, h3=4, d_out=3):
    """nn.Linear-style uniform(-1/sqrt(fan_in), 1/sqrt(fan_in)) init.

    Weights stored as (in, out); biases as (out,)."""
    dims = [(d_in, h1), (h1, h2), (h2, h3), (h3, d_out)]
    params = {}
    for i, (fi, fo) in enumerate(dims, start=1):
        key, kw, kb = jax.random.split(key, 3)
        bound = float(fi) ** -0.5
        params[f"w{i}"] = jax.random.uniform(
            kw, (fi, fo), jnp.float32, minval=-bound, maxval=bound)
        params[f"b{i}"] = jax.random.uniform(
            kb, (fo,), jnp.float32, minval=-bound, maxval=bound)
    return params


def _reference(x, p):
    h = jnp.maximum(x @ p["w1"] + p["b1"], 0.0)
    h = jnp.maximum(h @ p["w2"] + p["b2"], 0.0)
    h = jnp.maximum(h @ p["w3"] + p["b3"], 0.0)
    return h @ p["w4"] + p["b4"]


# ---------------------------------------------------------------------------
if __name__ == "__main__":
    key = jax.random.PRNGKey(0)
    kx, kp, kx2 = jax.random.split(key, 3)

    B, D_IN = 8, 6                       # LazyLinear infers d_in; demo uses 6
    params = init_params(kp, D_IN)

    # Small-batch check.
    x = jax.random.normal(kx, (B, D_IN), jnp.float32)
    out = jax.block_until_ready(fcffnn_forward(x, params))
    ref = _reference(x, params)
    assert out.shape == (B, 3)
    assert jnp.allclose(out, ref, atol=1e-4, rtol=1e-4)

    # Larger batch: exercises lane padding + multi-step ("parallel") grid.
    B2 = 3000
    x2 = jax.random.normal(kx2, (B2, D_IN), jnp.float32)
    out2 = jax.block_until_ready(fcffnn_forward(x2, params))
    ref2 = _reference(x2, params)
    assert out2.shape == (B2, 3)
    assert jnp.allclose(out2, ref2, atol=1e-4, rtol=1e-4)

    print("KERNEL_OK")
</pallas_src>

<mosaic_0001>
module attributes {stable_mosaic.version = 11 : i64} {
  func.func @_mlp_kernel(%arg0: i32, %arg1: memref<8x128xf32, #tpu.memory_space<vmem>>, %arg2: memref<64x128xf32, #tpu.memory_space<vmem>>, %arg3: memref<3x128xf32, #tpu.memory_space<vmem>>) attributes {dimension_semantics = [#tpu.dimension_semantics<parallel>], iteration_bounds = array<i64: 1>, scalar_prefetch = 0 : i64, scratch_operands = 0 : i64, tpu.core_type = #tpu.core_type<tc>, window_params = [{transform_indices = @transform_0, window_bounds = array<i64: 8, 128>}, {pipeline_mode = #tpu.pipeline_mode<synchronous>, transform_indices = @transform_1, window_bounds = array<i64: 64, 128>}, {transform_indices = @transform_2, window_bounds = array<i64: 3, 128>}]} {
    %c0 = arith.constant 0 : index
    %c0_0 = arith.constant 0 : index
    %0 = vector.load %arg1[%c0, %c0_0] : memref<8x128xf32, #tpu.memory_space<vmem>>, vector<8x128xf32>
    %c0_1 = arith.constant 0 : index
    %c0_2 = arith.constant 0 : index
    %1 = vector.load %arg2[%c0_1, %c0_2] : memref<64x128xf32, #tpu.memory_space<vmem>>, vector<8x8xf32>
    %c8 = arith.constant 8 : index
    %c0_3 = arith.constant 0 : index
    %2 = vector.load %arg2[%c8, %c0_3] : memref<64x128xf32, #tpu.memory_space<vmem>>, vector<8x8xf32>
    %c16 = arith.constant 16 : index
    %c0_4 = arith.constant 0 : index
    %3 = vector.load %arg2[%c16, %c0_4] : memref<64x128xf32, #tpu.memory_space<vmem>>, vector<8x8xf32>
    %c24 = arith.constant 24 : index
    %c0_5 = arith.constant 0 : index
    %4 = vector.load %arg2[%c24, %c0_5] : memref<64x128xf32, #tpu.memory_space<vmem>>, vector<8x8xf32>
    %c32 = arith.constant 32 : index
    %c0_6 = arith.constant 0 : index
    %5 = vector.load %arg2[%c32, %c0_6] : memref<64x128xf32, #tpu.memory_space<vmem>>, vector<8x1xf32>
    %c40 = arith.constant 40 : index
    %c0_7 = arith.constant 0 : index
    %6 = vector.load %arg2[%c40, %c0_7] : memref<64x128xf32, #tpu.memory_space<vmem>>, vector<8x1xf32>
    %c48 = arith.constant 48 : index
    %c0_8 = arith.constant 0 : index
    %7 = vector.load %arg2[%c48, %c0_8] : memref<64x128xf32, #tpu.memory_space<vmem>>, vector<8x1xf32>
    %c56 = arith.constant 56 : index
    %c0_9 = arith.constant 0 : index
    %8 = vector.load %arg2[%c56, %c0_9] : memref<64x128xf32, #tpu.memory_space<vmem>>, vector<8x1xf32>
    %cst = arith.constant dense<0.000000e+00> : vector<8x128xf32>
    %9 = tpu.matmul %1, %0, %cst {dimension_numbers = #tpu.dot_dimension_numbers<[1], [0], [0], [1], [0, 0, 1, 1], [], []>} : vector<8x8xf32>, vector<8x128xf32>, vector<8x128xf32> -> vector<8x128xf32>
    %10 = vector.broadcast %5 : vector<8x1xf32> to vector<8x128xf32>
    %11 = arith.addf %9, %10 : vector<8x128xf32>
    %cst_10 = arith.constant 0.000000e+00 : f32
    %12 = vector.broadcast %cst_10 : f32 to vector<8x128xf32>
    %13 = arith.maximumf %11, %12 : vector<8x128xf32>
    %cst_11 = arith.constant dense<0.000000e+00> : vector<8x128xf32>
    %14 = tpu.matmul %2, %13, %cst_11 {dimension_numbers = #tpu.dot_dimension_numbers<[1], [0], [0], [1], [0, 0, 1, 1], [], []>} : vector<8x8xf32>, vector<8x128xf32>, vector<8x128xf32> -> vector<8x128xf32>
    %15 = vector.broadcast %6 : vector<8x1xf32> to vector<8x128xf32>
    %16 = arith.addf %14, %15 : vector<8x128xf32>
    %cst_12 = arith.constant 0.000000e+00 : f32
    %17 = vector.broadcast %cst_12 : f32 to vector<8x128xf32>
    %18 = arith.maximumf %16, %17 : vector<8x128xf32>
    %cst_13 = arith.constant dense<0.000000e+00> : vector<8x128xf32>
    %19 = tpu.matmul %3, %18, %cst_13 {dimension_numbers = #tpu.dot_dimension_numbers<[1], [0], [0], [1], [0, 0, 1, 1], [], []>} : vector<8x8xf32>, vector<8x128xf32>, vector<8x128xf32> -> vector<8x128xf32>
    %20 = vector.broadcast %7 : vector<8x1xf32> to vector<8x128xf32>
    %21 = arith.addf %19, %20 : vector<8x128xf32>
    %cst_14 = arith.constant 0.000000e+00 : f32
    %22 = vector.broadcast %cst_14 : f32 to vector<8x128xf32>
    %23 = arith.maximumf %21, %22 : vector<8x128xf32>
    %cst_15 = arith.constant dense<0.000000e+00> : vector<8x128xf32>
    %24 = tpu.matmul %4, %23, %cst_15 {dimension_numbers = #tpu.dot_dimension_numbers<[1], [0], [0], [1], [0, 0, 1, 1], [], []>} : vector<8x8xf32>, vector<8x128xf32>, vector<8x128xf32> -> vector<8x128xf32>
    %25 = vector.broadcast %8 : vector<8x1xf32> to vector<8x128xf32>
    %26 = arith.addf %24, %25 : vector<8x128xf32>
    %27 = vector.extract_strided_slice %26 {offsets = [0, 0], sizes = [3, 128], strides = [1, 1]} : vector<8x128xf32> to vector<3x128xf32>
    %c0_16 = arith.constant 0 : index
    %c0_17 = arith.constant 0 : index
    %28 = vector.load %arg3[%c0_16, %c0_17] : memref<3x128xf32, #tpu.memory_space<vmem>>, vector<3x128xf32>
    tpu.vector_store %arg3[%c0_16, %c0_17], %27 {strides = array<i32>} : memref<3x128xf32, #tpu.memory_space<vmem>>, vector<3x128xf32>,
    return
  }
  func.func @transform_0(%arg0: i32) -> (i32, i32) {
    %c0_i32 = arith.constant 0 : i32
    %c0_i32_0 = arith.constant 0 : i32
    return %c0_i32, %arg0 : i32, i32
  }
  func.func @transform_1(%arg0: i32) -> (i32, i32) {
    %c0_i32 = arith.constant 0 : i32
    %c0_i32_0 = arith.constant 0 : i32
    %c0_i32_1 = arith.constant 0 : i32
    return %c0_i32, %c0_i32_0 : i32, i32
  }
  func.func @transform_2(%arg0: i32) -> (i32, i32) {
    %c0_i32 = arith.constant 0 : i32
    %c0_i32_0 = arith.constant 0 : i32
    return %c0_i32, %arg0 : i32, i32
  }
}

</mosaic_0001>

<llo_original>
// kernel: tpu_custom_call.1
$region0: #{tpu_custom_call.1}
  #allocation0 [shape = 'u32[]', space=smem, size = 0x4, offset = 0x4, fixed_abs, tag = 'smem constant byte address 0x4 - core index']
  #allocation1 [shape = 'u32[144,128]{1,0:T(1,128)}', space=vmem, size = 0x12000, scoped, tag = 'internal scratch']
  %s0 = inlined_call_operand.hbm [shape: f32[8,128], index: 0, kind: input, shape index: {}]
  %s1 = inlined_call_operand.hbm [shape: f32[64,128], index: 1, kind: input, shape index: {}]
  %s2 = inlined_call_operand.hbm [shape: f32[3,128], index: 2, kind: output, shape index: {}]
  %s3 = sld [smem:[#allocation0]]
  $region26: #{tpu_custom_call.1} parent=0
    _
  %s5 = ssub.s32 1, %s3
  %s6 = scalar_select 0, %s5, %s3
  $region1: #{tpu_custom_call.1} parent=0
    #allocation2 [shape = 'u8[4096]{0}', space=vmem, size = 0x1000, scoped, tag = 'input window, operand 0, single buffered']
    #allocation3 [shape = 's32[1]{0}', space=sflag, size = 0x4, scoped, tag = 'scoped memory for tpu_custom_call.1']
    #allocation4 [shape = 's32[1]{0}', space=sflag, size = 0x4, scoped, tag = 'scoped memory for tpu_custom_call.1']
    #allocation5 [shape = 'u8[32768]{0}', space=vmem, size = 0x8000, scoped, tag = 'input window, operand 1, single buffered']
    #allocation6 [shape = 's32[1]{0}', space=sflag, size = 0x4, scoped, tag = 'scoped memory for tpu_custom_call.1']
    #allocation7 [shape = 'u8[2048]{0}', space=vmem, size = 0x800, scoped, tag = 'output window, operand 0, single buffered']
    %7 = vsyncpa [#allocation3], 0
    %8 = vsyncpa [#allocation6], 0
    %9 = vsyncpa [#allocation4], 0
    // Predicated region
    $region2: #{tpu_custom_call.1} parent=1 // pred_check
      _
    $region3: #{tpu_custom_call.1} parent=1 // pred_check_branch
      %11 = sbr.rel (0) target = $region5
    $region4: #{tpu_custom_call.1} parent=1 // pred_region
      %s13 = ssub.s32 128, 128
      %14 = vsyncadd [#allocation3], %s13
      %s16 = sshll.u32 [#allocation2], 4
      %s17 = int_to_ptr.vmem [resolvable:$true] %s16
      %19 = dma.hbm_to_vmem [thread:$0]  %s0, 128, %s17, [#allocation3]
    $region5: #{tpu_custom_call.1} parent=1 // pred_fallthru
      _
    // Predicated region
    $region6: #{tpu_custom_call.1} parent=1 // pred_check
      _
    $region7: #{tpu_custom_call.1} parent=1 // pred_check_branch
      %21 = sbr.rel (0) target = $region9
    $region8: #{tpu_custom_call.1} parent=1 // pred_region
      %s23 = ssub.s32 1024, 1024
      %24 = vsyncadd [#allocation6], %s23
      %s25 = sshll.u32 [#allocation5], 4
      %s26 = int_to_ptr.vmem [resolvable:$true] %s25
      %31 = dma.hbm_to_vmem [thread:$0]  %s1, 1024, %s26, [#allocation6], 128, 128, 8
    $region9: #{tpu_custom_call.1} parent=1 // pred_fallthru
      _
    // Predicated region
    $region10: #{tpu_custom_call.1} parent=1 // pred_check
      _
    $region11: #{tpu_custom_call.1} parent=1 // pred_check_branch
      %33 = sbr.rel (0) target = $region13
    $region12: #{tpu_custom_call.1} parent=1 // pred_region
      %34 = dma.done [#allocation3], 128
    $region13: #{tpu_custom_call.1} parent=1 // pred_fallthru
      _
    // Predicated region
    $region14: #{tpu_custom_call.1} parent=1 // pred_check
      _
    $region15: #{tpu_custom_call.1} parent=1 // pred_check_branch
      %36 = sbr.rel (0) target = $region17
    $region16: #{tpu_custom_call.1} parent=1 // pred_region
      %37 = dma.done [#allocation6], 1024
    $region17: #{tpu_custom_call.1} parent=1 // pred_fallthru
      _
    %v38 = vld [vmem:[#allocation2] sm:$0xff]
    %v39 = vld [vmem:[#allocation5] sm:$0xff]
    %v40 = vld [vmem:[#allocation5 + $0x8] sm:$0xff]
    %v41 = vld [vmem:[#allocation5 + $0x10] sm:$0xff]
    %v42 = vld [vmem:[#allocation5 + $0x18] sm:$0xff]
    %v43 = vld [vmem:[#allocation5 + $0x20] sm:$0xff]
    %v44 = vld [vmem:[#allocation5 + $0x28] sm:$0xff]
    %v45 = vld [vmem:[#allocation5 + $0x30] sm:$0xff]
    %v46 = vld [vmem:[#allocation5 + $0x38] sm:$0xff]
    %48 = vset.pattern.permute.xlu0 0
    %49 = vperm.xlu0 %48, %v43
    %v50 = vpop.permute.xlu0 %49
    %vm52 = vcmask 64512
    %v54 = vsel %vm52, %v39, 0
    %56 = vmatprep.subr.mxu0 0.0
    %57 = vmatpush1.msra.mxu0 %v38
    %58 = vmatprep.subr.mxu0 0.0
    %59 = vmatpush1.msra.mxu0 0.0
    %60 = vmatprep.subr.mxu0 0.0
    %61 = vmatpush1.msra.mxu0 0.0
    %62 = vmatprep.subr.mxu0 0.0
    %63 = vmatpush1.msra.mxu0 0.0
    %64 = vmatprep.subr.mxu0 0.0
    %65 = vmatpush1.msra.mxu0 0.0
    %66 = vmatprep.subr.mxu0 0.0
    %67 = vmatpush1.msra.mxu0 0.0
    %68 = vmatprep.subr.mxu0 0.0
    %69 = vmatpush1.msra.mxu0 0.0
    %70 = vmatprep.subr.mxu0 0.0
    %71 = vmatpush1.msra.mxu0 0.0
    %72 = vmatprep.subr.mxu0 0.0
    %73 = vmatpush1.msra.mxu0 0.0
    %74 = vmatprep.subr.mxu0 0.0
    %75 = vmatpush1.msra.mxu0 0.0
    %76 = vmatprep.subr.mxu0 0.0
    %77 = vmatpush1.msra.mxu0 0.0
    %78 = vmatprep.subr.mxu0 0.0
    %79 = vmatpush1.msra.mxu0 0.0
    %80 = vmatprep.subr.mxu0 0.0
    %81 = vmatpush1.msra.mxu0 0.0
    %82 = vmatprep.subr.mxu0 0.0
    %83 = vmatpush1.msra.mxu0 0.0
    %84 = vmatprep.subr.mxu0 0.0
    %85 = vmatpush1.msra.mxu0 0.0
    %86 = vmatprep.subr.mxu0 0.0
    %87 = vmatpush1.msra.mxu0 0.0
    %88 = vmatprep.subr.mxu0 0.0
    %89 = vmatpush1.msra.mxu0 0.0
    %90 = vmatprep.subr.mxu0 0.0
    %91 = vmatpush1.msra.mxu0 0.0
    %92 = vmatprep.subr.mxu0 0.0
    %93 = vmatpush1.msra.mxu0 0.0
    %94 = vmatprep.subr.mxu0 0.0
    %95 = vmatpush1.msra.mxu0 0.0
    %96 = vmatprep.subr.mxu0 0.0
    %97 = vmatpush1.msra.mxu0 0.0
    %98 = vmatprep.subr.mxu0 0.0
    %99 = vmatpush1.msra.mxu0 0.0
    %100 = vmatprep.subr.mxu0 0.0
    %101 = vmatpush1.msra.mxu0 0.0
    %102 = vmatprep.subr.mxu0 0.0
    %103 = vmatpush1.msra.mxu0 0.0
    %104 = vmatprep.subr.mxu0 0.0
    %105 = vmatpush1.msra.mxu0 0.0
    %106 = vmatprep.subr.mxu0 0.0
    %107 = vmatpush1.msra.mxu0 0.0
    %108 = vmatprep.subr.mxu0 0.0
    %109 = vmatpush1.msra.mxu0 0.0
    %110 = vmatprep.subr.mxu0 0.0
    %111 = vmatpush1.msra.mxu0 0.0
    %112 = vmatprep.subr.mxu0 0.0
    %113 = vmatpush1.msra.mxu0 0.0
    %114 = vmatprep.subr.mxu0 0.0
    %115 = vmatpush1.msra.mxu0 0.0
    %116 = vmatprep.subr.mxu0 0.0
    %117 = vmatpush1.msra.mxu0 0.0
    %118 = vmatprep.subr.mxu0 0.0
    %119 = vmatpush1.msra.mxu0 0.0
    %120 = vmatprep.mubr.f32.mxu0 0.0
    %121 = vmatmul.mubr.f32.gmra.mrb[0].mxu0 %v54
    %v122 = vpop.f32.mrb[0].mxu0
    %v123 = vadd.f32 %v50, %v122
    %v124 = vpop.f32.mrb[0].mxu0
    %125 = vdwg.mxu0
    %v126 = vmax.f32 %v123, 0.0
    %128 = vset.pattern.permute.xlu0 0
    %129 = vperm.xlu0 %128, %v44
    %v130 = vpop.permute.xlu0 %129
    %v133 = vsel %vm52, %v40, 0
    %135 = vmatprep.subr.mxu0 0.0
    %136 = vmatpush1.msra.mxu0 %v126
    %137 = vmatprep.subr.mxu0 0.0
    %138 = vmatpush1.msra.mxu0 0.0
    %139 = vmatprep.subr.mxu0 0.0
    %140 = vmatpush1.msra.mxu0 0.0
    %141 = vmatprep.subr.mxu0 0.0
    %142 = vmatpush1.msra.mxu0 0.0
    %143 = vmatprep.subr.mxu0 0.0
    %144 = vmatpush1.msra.mxu0 0.0
    %145 = vmatprep.subr.mxu0 0.0
    %146 = vmatpush1.msra.mxu0 0.0
    %147 = vmatprep.subr.mxu0 0.0
    %148 = vmatpush1.msra.mxu0 0.0
    %149 = vmatprep.subr.mxu0 0.0
    %150 = vmatpush1.msra.mxu0 0.0
    %151 = vmatprep.subr.mxu0 0.0
    %152 = vmatpush1.msra.mxu0 0.0
    %153 = vmatprep.subr.mxu0 0.0
    %154 = vmatpush1.msra.mxu0 0.0
    %155 = vmatprep.subr.mxu0 0.0
    %156 = vmatpush1.msra.mxu0 0.0
    %157 = vmatprep.subr.mxu0 0.0
    %158 = vmatpush1.msra.mxu0 0.0
    %159 = vmatprep.subr.mxu0 0.0
    %160 = vmatpush1.msra.mxu0 0.0
    %161 = vmatprep.subr.mxu0 0.0
    %162 = vmatpush1.msra.mxu0 0.0
    %163 = vmatprep.subr.mxu0 0.0
    %164 = vmatpush1.msra.mxu0 0.0
    %165 = vmatprep.subr.mxu0 0.0
    %166 = vmatpush1.msra.mxu0 0.0
    %167 = vmatprep.subr.mxu0 0.0
    %168 = vmatpush1.msra.mxu0 0.0
    %169 = vmatprep.subr.mxu0 0.0
    %170 = vmatpush1.msra.mxu0 0.0
    %171 = vmatprep.subr.mxu0 0.0
    %172 = vmatpush1.msra.mxu0 0.0
    %173 = vmatprep.subr.mxu0 0.0
    %174 = vmatpush1.msra.mxu0 0.0
    %175 = vmatprep.subr.mxu0 0.0
    %176 = vmatpush1.msra.mxu0 0.0
    %177 = vmatprep.subr.mxu0 0.0
    %178 = vmatpush1.msra.mxu0 0.0
    %179 = vmatprep.subr.mxu0 0.0
    %180 = vmatpush1.msra.mxu0 0.0
    %181 = vmatprep.subr.mxu0 0.0
    %182 = vmatpush1.msra.mxu0 0.0
    %183 = vmatprep.subr.mxu0 0.0
    %184 = vmatpush1.msra.mxu0 0.0
    %185 = vmatprep.subr.mxu0 0.0
    %186 = vmatpush1.msra.mxu0 0.0
    %187 = vmatprep.subr.mxu0 0.0
    %188 = vmatpush1.msra.mxu0 0.0
    %189 = vmatprep.subr.mxu0 0.0
    %190 = vmatpush1.msra.mxu0 0.0
    %191 = vmatprep.subr.mxu0 0.0
    %192 = vmatpush1.msra.mxu0 0.0
    %193 = vmatprep.subr.mxu0 0.0
    %194 = vmatpush1.msra.mxu0 0.0
    %195 = vmatprep.subr.mxu0 0.0
    %196 = vmatpush1.msra.mxu0 0.0
    %197 = vmatprep.subr.mxu0 0.0
    %198 = vmatpush1.msra.mxu0 0.0
    %199 = vmatprep.mubr.f32.mxu0 0.0
    %200 = vmatmul.mubr.f32.gmra.mrb[0].mxu0 %v133
    %v201 = vpop.f32.mrb[0].mxu0
    %v202 = vadd.f32 %v130, %v201
    %v203 = vpop.f32.mrb[0].mxu0
    %204 = vdwg.mxu0
    %v205 = vmax.f32 %v202, 0.0
    %207 = vset.pattern.permute.xlu0 0
    %208 = vperm.xlu0 %207, %v45
    %v209 = vpop.permute.xlu0 %208
    %v212 = vsel %vm52, %v41, 0
    %214 = vmatprep.subr.mxu0 0.0
    %215 = vmatpush1.msra.mxu0 %v205
    %216 = vmatprep.subr.mxu0 0.0
    %217 = vmatpush1.msra.mxu0 0.0
    %218 = vmatprep.subr.mxu0 0.0
    %219 = vmatpush1.msra.mxu0 0.0
    %220 = vmatprep.subr.mxu0 0.0
    %221 = vmatpush1.msra.mxu0 0.0
    %222 = vmatprep.subr.mxu0 0.0
    %223 = vmatpush1.msra.mxu0 0.0
    %224 = vmatprep.subr.mxu0 0.0
    %225 = vmatpush1.msra.mxu0 0.0
    %226 = vmatprep.subr.mxu0 0.0
    %227 = vmatpush1.msra.mxu0 0.0
    %228 = vmatprep.subr.mxu0 0.0
    %229 = vmatpush1.msra.mxu0 0.0
    %230 = vmatprep.subr.mxu0 0.0
    %231 = vmatpush1.msra.mxu0 0.0
    %232 = vmatprep.subr.mxu0 0.0
    %233 = vmatpush1.msra.mxu0 0.0
    %234 = vmatprep.subr.mxu0 0.0
    %235 = vmatpush1.msra.mxu0 0.0
    %236 = vmatprep.subr.mxu0 0.0
    %237 = vmatpush1.msra.mxu0 0.0
    %238 = vmatprep.subr.mxu0 0.0
    %239 = vmatpush1.msra.mxu0 0.0
    %240 = vmatprep.subr.mxu0 0.0
    %241 = vmatpush1.msra.mxu0 0.0
    %242 = vmatprep.subr.mxu0 0.0
    %243 = vmatpush1.msra.mxu0 0.0
    %244 = vmatprep.subr.mxu0 0.0
    %245 = vmatpush1.msra.mxu0 0.0
    %246 = vmatprep.subr.mxu0 0.0
    %247 = vmatpush1.msra.mxu0 0.0
    %248 = vmatprep.subr.mxu0 0.0
    %249 = vmatpush1.msra.mxu0 0.0
    %250 = vmatprep.subr.mxu0 0.0
    %251 = vmatpush1.msra.mxu0 0.0
    %252 = vmatprep.subr.mxu0 0.0
    %253 = vmatpush1.msra.mxu0 0.0
    %254 = vmatprep.subr.mxu0 0.0
    %255 = vmatpush1.msra.mxu0 0.0
    %256 = vmatprep.subr.mxu0 0.0
    %257 = vmatpush1.msra.mxu0 0.0
    %258 = vmatprep.subr.mxu0 0.0
    %259 = vmatpush1.msra.mxu0 0.0
    %260 = vmatprep.subr.mxu0 0.0
    %261 = vmatpush1.msra.mxu0 0.0
    %262 = vmatprep.subr.mxu0 0.0
    %263 = vmatpush1.msra.mxu0 0.0
    %264 = vmatprep.subr.mxu0 0.0
    %265 = vmatpush1.msra.mxu0 0.0
    %266 = vmatprep.subr.mxu0 0.0
    %267 = vmatpush1.msra.mxu0 0.0
    %268 = vmatprep.subr.mxu0 0.0
    %269 = vmatpush1.msra.mxu0 0.0
    %270 = vmatprep.subr.mxu0 0.0
    %271 = vmatpush1.msra.mxu0 0.0
    %272 = vmatprep.subr.mxu0 0.0
    %273 = vmatpush1.msra.mxu0 0.0
    %274 = vmatprep.subr.mxu0 0.0
    %275 = vmatpush1.msra.mxu0 0.0
    %276 = vmatprep.subr.mxu0 0.0
    %277 = vmatpush1.msra.mxu0 0.0
    %278 = vmatprep.mubr.f32.mxu0 0.0
    %279 = vmatmul.mubr.f32.gmra.mrb[0].mxu0 %v212
    %v280 = vpop.f32.mrb[0].mxu0
    %v281 = vadd.f32 %v209, %v280
    %v282 = vpop.f32.mrb[0].mxu0
    %283 = vdwg.mxu0
    %v284 = vmax.f32 %v281, 0.0
    %286 = vset.pattern.permute.xlu0 0
    %287 = vperm.xlu0 %286, %v46
    %v288 = vpop.permute.xlu0 %287
    %v291 = vsel %vm52, %v42, 0
    %293 = vmatprep.subr.mxu0 0.0
    %294 = vmatpush1.msra.mxu0 %v284
    %295 = vmatprep.subr.mxu0 0.0
    %296 = vmatpush1.msra.mxu0 0.0
    %297 = vmatprep.subr.mxu0 0.0
    %298 = vmatpush1.msra.mxu0 0.0
    %299 = vmatprep.subr.mxu0 0.0
    %300 = vmatpush1.msra.mxu0 0.0
    %301 = vmatprep.subr.mxu0 0.0
    %302 = vmatpush1.msra.mxu0 0.0
    %303 = vmatprep.subr.mxu0 0.0
    %304 = vmatpush1.msra.mxu0 0.0
    %305 = vmatprep.subr.mxu0 0.0
    %306 = vmatpush1.msra.mxu0 0.0
    %307 = vmatprep.subr.mxu0 0.0
    %308 = vmatpush1.msra.mxu0 0.0
    %309 = vmatprep.subr.mxu0 0.0
    %310 = vmatpush1.msra.mxu0 0.0
    %311 = vmatprep.subr.mxu0 0.0
    %312 = vmatpush1.msra.mxu0 0.0
    %313 = vmatprep.subr.mxu0 0.0
    %314 = vmatpush1.msra.mxu0 0.0
    %315 = vmatprep.subr.mxu0 0.0
    %316 = vmatpush1.msra.mxu0 0.0
    %317 = vmatprep.subr.mxu0 0.0
    %318 = vmatpush1.msra.mxu0 0.0
    %319 = vmatprep.subr.mxu0 0.0
    %320 = vmatpush1.msra.mxu0 0.0
    %321 = vmatprep.subr.mxu0 0.0
    %322 = vmatpush1.msra.mxu0 0.0
    %323 = vmatprep.subr.mxu0 0.0
    %324 = vmatpush1.msra.mxu0 0.0
    %325 = vmatprep.subr.mxu0 0.0
    %326 = vmatpush1.msra.mxu0 0.0
    %327 = vmatprep.subr.mxu0 0.0
    %328 = vmatpush1.msra.mxu0 0.0
    %329 = vmatprep.subr.mxu0 0.0
    %330 = vmatpush1.msra.mxu0 0.0
    %331 = vmatprep.subr.mxu0 0.0
    %332 = vmatpush1.msra.mxu0 0.0
    %333 = vmatprep.subr.mxu0 0.0
    %334 = vmatpush1.msra.mxu0 0.0
    %335 = vmatprep.subr.mxu0 0.0
    %336 = vmatpush1.msra.mxu0 0.0
    %337 = vmatprep.subr.mxu0 0.0
    %338 = vmatpush1.msra.mxu0 0.0
    %339 = vmatprep.subr.mxu0 0.0
    %340 = vmatpush1.msra.mxu0 0.0
    %341 = vmatprep.subr.mxu0 0.0
    %342 = vmatpush1.msra.mxu0 0.0
    %343 = vmatprep.subr.mxu0 0.0
    %344 = vmatpush1.msra.mxu0 0.0
    %345 = vmatprep.subr.mxu0 0.0
    %346 = vmatpush1.msra.mxu0 0.0
    %347 = vmatprep.subr.mxu0 0.0
    %348 = vmatpush1.msra.mxu0 0.0
    %349 = vmatprep.subr.mxu0 0.0
    %350 = vmatpush1.msra.mxu0 0.0
    %351 = vmatprep.subr.mxu0 0.0
    %352 = vmatpush1.msra.mxu0 0.0
    %353 = vmatprep.subr.mxu0 0.0
    %354 = vmatpush1.msra.mxu0 0.0
    %355 = vmatprep.subr.mxu0 0.0
    %356 = vmatpush1.msra.mxu0 0.0
    %357 = vmatprep.mubr.f32.mxu0 0.0
    %358 = vmatmul.mubr.f32.gmra.mrb[0].mxu0 %v291
    %v359 = vpop.f32.mrb[0].mxu0
    %v360 = vadd.f32 %v288, %v359
    %v361 = vpop.f32.mrb[0].mxu0
    %362 = vdwg.mxu0
    %363 = vst [vmem:[#allocation7] sm:$0x7] %v360
    // Predicated region
    $region18: #{tpu_custom_call.1} parent=1 // pred_check
      _
    $region19: #{tpu_custom_call.1} parent=1 // pred_check_branch
      %365 = sbr.rel (0) target = $region21
    $region20: #{tpu_custom_call.1} parent=1 // pred_region
      %s367 = ssub.s32 64, 64
      %368 = vsyncadd [#allocation4], %s367
      %s370 = sshll.u32 [#allocation7], 4
      %s371 = int_to_ptr.vmem [resolvable:$true] %s370
      %373 = dma.vmem_to_hbm [thread:$0]  %s371, 64, %s2, [#allocation4]
    $region21: #{tpu_custom_call.1} parent=1 // pred_fallthru
      _
    // Predicated region
    $region22: #{tpu_custom_call.1} parent=1 // pred_check
      _
    $region23: #{tpu_custom_call.1} parent=1 // pred_check_branch
      %375 = sbr.rel (0) target = $region25
    $region24: #{tpu_custom_call.1} parent=1 // pred_region
      %376 = dma.done [#allocation4], 64
    $region25: #{tpu_custom_call.1} parent=1 // pred_fallthru
      _
    %377 = vsyncpa [#allocation3], 1
    %378 = vsyncpa [#allocation6], 1
    %379 = vsyncpa [#allocation4], 1

</llo_original>
